<compile_context>
chip_gen: v6e
topology: v6e:2x2x1
jax: 0.10.0
libtpu: 0.0.40
codegen_flags: <defaults>
</compile_context>

<pallas_src>
import jax
import jax.numpy as jnp
from jax.experimental import pallas as pl
from jax.experimental.pallas import tpu as pltpu


def simple_nn_kernel(x_ref, w1_ref, b1_ref, w2_ref, b2_ref,
                     w3_ref, b3_ref, w4_ref, b4_ref, o_ref):
    # x_ref: (tb, D) natural-layout input tile.
    # Layer 1: contract the feature dim of BOTH operands -> (128, tb), which
    # puts the batch on the lane axis for everything downstream.
    h = jnp.einsum("od,bd->ob", w1_ref[...], x_ref[...],
                   preferred_element_type=jnp.float32)
    h = jnp.maximum(h + b1_ref[...], 0.0)
    # Layer 2: (64, 128) @ (128, tb) -> (64, tb), ReLU
    h = jnp.dot(w2_ref[...], h, preferred_element_type=jnp.float32)
    h = jnp.maximum(h + b2_ref[...], 0.0)
    # Layer 3: (32, 64) @ (64, tb) -> (32, tb), ReLU
    h = jnp.dot(w3_ref[...], h, preferred_element_type=jnp.float32)
    h = jnp.maximum(h + b3_ref[...], 0.0)
    # Layer 4 (32 -> 1): VPU broadcast-multiply + sublane reduce (avoids an
    # N=1 MXU matmul).  b4 is a scalar read from SMEM.
    logits = jnp.sum(h * w4_ref[...], axis=0, keepdims=True) + b4_ref[0, 0]
    # Lane-dense (1, tb) store.
    o_ref[...] = jax.nn.sigmoid(logits)


def _cores_per_chip():
    """2 on v7x (megacore), 1 on v5e/v6e.  Falls back to 1 if unknown."""
    try:
        kind = jax.devices()[0].device_kind.lower()
    except Exception:
        return 1
    return 2 if ("v7" in kind or "tpu7" in kind) else 1


def _choose_tb(b_pad, cores):
    """Pick a lane-dense batch tile (multiple of 128) that divides b_pad."""
    nblk = b_pad // 128
    max_blk = 64                      # 64 * 128 = 8192 rows per tile
    if nblk <= 1:
        return b_pad                  # single grid step (e.g. the B=128 test)
    if cores == 1:
        # Single TensorCore: the grid is a serial loop, so splitting small
        # batches only adds per-step overhead.  One tile up to 8192 rows.
        if nblk <= max_blk:
            return b_pad
        cap = max_blk
    else:
        # v7x: guarantee >= `cores` grid steps so both TensorCores get work.
        cap = max(1, min(max_blk, nblk // cores))
    # Largest tile (in 128-row blocks) <= cap that divides the batch evenly.
    t = cap
    while nblk % t:
        t -= 1
    return t * 128


def simple_nn_forward(x, params, *, tb=None, use_bf16_x=False):
    """x: (B, input_dim) float32.  params: PyTorch-layout W (out, in), b (out,)."""
    B, D = x.shape
    b_pad = 128 * pl.cdiv(B, 128)
    if tb is None:
        tb = _choose_tb(b_pad, _cores_per_chip())
    assert b_pad % tb == 0 and (tb % 128 == 0 or tb == b_pad)

    # Only the batch dim is zero-padded (harmless: padded rows go through the
    # MLP and are sliced off below).  No feature padding, no transpose pass.
    x_in = jnp.pad(x.astype(jnp.float32), ((0, b_pad - B), (0, 0)))  # (b_pad, D)
    w1 = params["w1"]                                   # (128, D)
    if use_bf16_x:
        # Correctness-gated: halves streamed bytes; will NOT meet 2e-5 tol.
        x_in = x_in.astype(jnp.bfloat16)
        w1 = w1.astype(jnp.bfloat16)
    w2 = params["w2"]                                   # (64, 128)
    w3 = params["w3"]                                   # (32, 64)
    b1 = params["b1"][:, None]                          # (128, 1)
    b2 = params["b2"][:, None]                          # (64, 1)
    b3 = params["b3"][:, None]                          # (32, 1)
    w4 = params["w4"].T                                 # (32, 1)
    b4 = params["b4"].reshape(1, 1)                     # SMEM scalar

    def const_spec(arr):
        # Whole array, same block index every grid step (not re-DMA'd).
        return pl.BlockSpec(arr.shape, lambda i: (0, 0))

    out_row = pl.pallas_call(
        simple_nn_kernel,
        out_shape=jax.ShapeDtypeStruct((1, b_pad), jnp.float32),
        grid_spec=pltpu.PrefetchScalarGridSpec(
            num_scalar_prefetch=0,
            grid=(b_pad // tb,),
            in_specs=[
                pl.BlockSpec((tb, D), lambda i: (i, 0)),   # x tile, natural layout
                const_spec(w1), const_spec(b1),
                const_spec(w2), const_spec(b2),
                const_spec(w3), const_spec(b3),
                const_spec(w4),
                pl.BlockSpec(memory_space=pltpu.MemorySpace.SMEM),  # b4 scalar
            ],
            out_specs=pl.BlockSpec((1, tb), lambda i: (0, i)),      # lane-dense
        ),
        compiler_params=pltpu.CompilerParams(
            dimension_semantics=("parallel",)),
    )(x_in, w1, b1, w2, b2, w3, b3, w4, b4)

    return out_row[0, :B].reshape(B, 1)


def init_params(key, input_dim):
    """nn.Linear-style init U(-1/sqrt(fan_in), 1/sqrt(fan_in)).
    PyTorch layout: W (out_features, in_features), b (out_features,)."""
    dims = [(input_dim, 128), (128, 64), (64, 32), (32, 1)]
    params = {}
    for idx, (fan_in, fan_out) in enumerate(dims, start=1):
        key, kw, kb = jax.random.split(key, 3)
        bound = 1.0 / jnp.sqrt(jnp.float32(fan_in))
        params[f"w{idx}"] = jax.random.uniform(
            kw, (fan_out, fan_in), jnp.float32, -bound, bound)
        params[f"b{idx}"] = jax.random.uniform(
            kb, (fan_out,), jnp.float32, -bound, bound)
    return params


def reference_forward(x, p):
    h = jnp.maximum(x @ p["w1"].T + p["b1"], 0.0)
    h = jnp.maximum(h @ p["w2"].T + p["b2"], 0.0)
    h = jnp.maximum(h @ p["w3"].T + p["b3"], 0.0)
    return jax.nn.sigmoid(h @ p["w4"].T + p["b4"])


if __name__ == "__main__":
    key = jax.random.PRNGKey(0)
    key, kx, kp = jax.random.split(key, 3)

    batch, input_dim = 128, 32
    x = jax.random.normal(kx, (batch, input_dim), jnp.float32)
    params = init_params(kp, input_dim)

    out = simple_nn_forward(x, params)
    out = jax.block_until_ready(out)

    ref = reference_forward(x, params)
    assert out.shape == (batch, 1)
    assert jnp.allclose(out, ref, atol=2e-5, rtol=2e-5), "mismatch vs reference"
    print("KERNEL_OK")
</pallas_src>

<mosaic_0001>
module attributes {stable_mosaic.version = 11 : i64} {
  func.func @simple_nn_kernel(%arg0: i32, %arg1: memref<128x32xf32, #tpu.memory_space<vmem>>, %arg2: memref<128x32xf32, #tpu.memory_space<vmem>>, %arg3: memref<128x1xf32, #tpu.memory_space<vmem>>, %arg4: memref<64x128xf32, #tpu.memory_space<vmem>>, %arg5: memref<64x1xf32, #tpu.memory_space<vmem>>, %arg6: memref<32x64xf32, #tpu.memory_space<vmem>>, %arg7: memref<32x1xf32, #tpu.memory_space<vmem>>, %arg8: memref<32x1xf32, #tpu.memory_space<vmem>>, %arg9: memref<1x1xf32, #tpu.memory_space<smem>>, %arg10: memref<1x128xf32, #tpu.memory_space<vmem>>) attributes {dimension_semantics = [#tpu.dimension_semantics<parallel>], iteration_bounds = array<i64: 1>, scalar_prefetch = 0 : i64, scratch_operands = 0 : i64, tpu.core_type = #tpu.core_type<tc>, window_params = [{transform_indices = @transform_0, window_bounds = array<i64: 128, 32>}, {pipeline_mode = #tpu.pipeline_mode<synchronous>, transform_indices = @transform_1, window_bounds = array<i64: 128, 32>}, {pipeline_mode = #tpu.pipeline_mode<synchronous>, transform_indices = @transform_2, window_bounds = array<i64: 128, 1>}, {pipeline_mode = #tpu.pipeline_mode<synchronous>, transform_indices = @transform_3, window_bounds = array<i64: 64, 128>}, {pipeline_mode = #tpu.pipeline_mode<synchronous>, transform_indices = @transform_4, window_bounds = array<i64: 64, 1>}, {pipeline_mode = #tpu.pipeline_mode<synchronous>, transform_indices = @transform_5, window_bounds = array<i64: 32, 64>}, {pipeline_mode = #tpu.pipeline_mode<synchronous>, transform_indices = @transform_6, window_bounds = array<i64: 32, 1>}, {pipeline_mode = #tpu.pipeline_mode<synchronous>, transform_indices = @transform_7, window_bounds = array<i64: 32, 1>}, {transform_indices = @transform_8, window_bounds = array<i64: 1, 1>}, {transform_indices = @transform_9, window_bounds = array<i64: 1, 128>}]} {
    %c0 = arith.constant 0 : index
    %c0_0 = arith.constant 0 : index
    %0 = vector.load %arg2[%c0, %c0_0] : memref<128x32xf32, #tpu.memory_space<vmem>>, vector<128x32xf32>
    %c0_1 = arith.constant 0 : index
    %c0_2 = arith.constant 0 : index
    %1 = vector.load %arg1[%c0_1, %c0_2] : memref<128x32xf32, #tpu.memory_space<vmem>>, vector<128x32xf32>
    "tpu.trace_start"() <{level = 10 : i32, message = "od,bd->ob"}> : () -> ()
    %cst = arith.constant dense<0.000000e+00> : vector<128x128xf32>
    %2 = tpu.matmul %0, %1, %cst {dimension_numbers = #tpu.dot_dimension_numbers<[1], [1], [0], [0], [0, 0, 1, 0], [], []>} : vector<128x32xf32>, vector<128x32xf32>, vector<128x128xf32> -> vector<128x128xf32>
    "tpu.trace_stop"() : () -> ()
    %c0_3 = arith.constant 0 : index
    %c0_4 = arith.constant 0 : index
    %3 = vector.load %arg3[%c0_3, %c0_4] : memref<128x1xf32, #tpu.memory_space<vmem>>, vector<128x1xf32>
    %4 = vector.broadcast %3 : vector<128x1xf32> to vector<128x128xf32>
    %5 = arith.addf %2, %4 : vector<128x128xf32>
    %cst_5 = arith.constant 0.000000e+00 : f32
    %6 = vector.broadcast %cst_5 : f32 to vector<128x128xf32>
    %7 = arith.maximumf %5, %6 : vector<128x128xf32>
    %c0_6 = arith.constant 0 : index
    %c0_7 = arith.constant 0 : index
    %8 = vector.load %arg4[%c0_6, %c0_7] : memref<64x128xf32, #tpu.memory_space<vmem>>, vector<64x128xf32>
    %cst_8 = arith.constant dense<0.000000e+00> : vector<64x128xf32>
    %9 = tpu.matmul %8, %7, %cst_8 {dimension_numbers = #tpu.dot_dimension_numbers<[1], [0], [0], [1], [0, 0, 1, 1], [], []>} : vector<64x128xf32>, vector<128x128xf32>, vector<64x128xf32> -> vector<64x128xf32>
    %c0_9 = arith.constant 0 : index
    %c0_10 = arith.constant 0 : index
    %10 = vector.load %arg5[%c0_9, %c0_10] : memref<64x1xf32, #tpu.memory_space<vmem>>, vector<64x1xf32>
    %11 = vector.broadcast %10 : vector<64x1xf32> to vector<64x128xf32>
    %12 = arith.addf %9, %11 : vector<64x128xf32>
    %cst_11 = arith.constant 0.000000e+00 : f32
    %13 = vector.broadcast %cst_11 : f32 to vector<64x128xf32>
    %14 = arith.maximumf %12, %13 : vector<64x128xf32>
    %c0_12 = arith.constant 0 : index
    %c0_13 = arith.constant 0 : index
    %15 = vector.load %arg6[%c0_12, %c0_13] : memref<32x64xf32, #tpu.memory_space<vmem>>, vector<32x64xf32>
    %cst_14 = arith.constant dense<0.000000e+00> : vector<32x128xf32>
    %16 = tpu.matmul %15, %14, %cst_14 {dimension_numbers = #tpu.dot_dimension_numbers<[1], [0], [0], [1], [0, 0, 1, 1], [], []>} : vector<32x64xf32>, vector<64x128xf32>, vector<32x128xf32> -> vector<32x128xf32>
    %c0_15 = arith.constant 0 : index
    %c0_16 = arith.constant 0 : index
    %17 = vector.load %arg7[%c0_15, %c0_16] : memref<32x1xf32, #tpu.memory_space<vmem>>, vector<32x1xf32>
    %18 = vector.broadcast %17 : vector<32x1xf32> to vector<32x128xf32>
    %19 = arith.addf %16, %18 : vector<32x128xf32>
    %cst_17 = arith.constant 0.000000e+00 : f32
    %20 = vector.broadcast %cst_17 : f32 to vector<32x128xf32>
    %21 = arith.maximumf %19, %20 : vector<32x128xf32>
    %c0_18 = arith.constant 0 : index
    %c0_19 = arith.constant 0 : index
    %22 = vector.load %arg8[%c0_18, %c0_19] : memref<32x1xf32, #tpu.memory_space<vmem>>, vector<32x1xf32>
    %23 = vector.broadcast %22 : vector<32x1xf32> to vector<32x128xf32>
    %24 = arith.mulf %21, %23 : vector<32x128xf32>
    %cst_20 = arith.constant dense<0.000000e+00> : vector<128xf32>
    %25 = vector.multi_reduction <add>, %24, %cst_20 [0] : vector<32x128xf32> to vector<128xf32>
    %26 = vector.shape_cast %25 : vector<128xf32> to vector<1x128xf32>
    %c0_21 = arith.constant 0 : index
    %c0_22 = arith.constant 0 : index
    %27 = memref.load %arg9[%c0_21, %c0_22] : memref<1x1xf32, #tpu.memory_space<smem>>
    %28 = vector.broadcast %27 : f32 to vector<1x128xf32>
    %29 = arith.addf %26, %28 : vector<1x128xf32>
    %30 = arith.negf %29 : vector<1x128xf32>
    %31 = math.exp %30 : vector<1x128xf32>
    %cst_23 = arith.constant 1.000000e+00 : f32
    %32 = vector.broadcast %cst_23 : f32 to vector<1x128xf32>
    %33 = arith.addf %32, %31 : vector<1x128xf32>
    %34 = arith.divf %32, %33 : vector<1x128xf32>
    %c0_24 = arith.constant 0 : index
    %c0_25 = arith.constant 0 : index
    %35 = vector.load %arg10[%c0_24, %c0_25] : memref<1x128xf32, #tpu.memory_space<vmem>>, vector<1x128xf32>
    tpu.vector_store %arg10[%c0_24, %c0_25], %34 {strides = array<i32>} : memref<1x128xf32, #tpu.memory_space<vmem>>, vector<1x128xf32>,
    return
  }
  func.func @transform_0(%arg0: i32) -> (i32, i32) {
    %c0_i32 = arith.constant 0 : i32
    %c0_i32_0 = arith.constant 0 : i32
    return %arg0, %c0_i32 : i32, i32
  }
  func.func @transform_1(%arg0: i32) -> (i32, i32) {
    %c0_i32 = arith.constant 0 : i32
    %c0_i32_0 = arith.constant 0 : i32
    %c0_i32_1 = arith.constant 0 : i32
    return %c0_i32, %c0_i32_0 : i32, i32
  }
  func.func @transform_2(%arg0: i32) -> (i32, i32) {
    %c0_i32 = arith.constant 0 : i32
    %c0_i32_0 = arith.constant 0 : i32
    %c0_i32_1 = arith.constant 0 : i32
    return %c0_i32, %c0_i32_0 : i32, i32
  }
  func.func @transform_3(%arg0: i32) -> (i32, i32) {
    %c0_i32 = arith.constant 0 : i32
    %c0_i32_0 = arith.constant 0 : i32
    %c0_i32_1 = arith.constant 0 : i32
    return %c0_i32, %c0_i32_0 : i32, i32
  }
  func.func @transform_4(%arg0: i32) -> (i32, i32) {
    %c0_i32 = arith.constant 0 : i32
    %c0_i32_0 = arith.constant 0 : i32
    %c0_i32_1 = arith.constant 0 : i32
    return %c0_i32, %c0_i32_0 : i32, i32
  }
  func.func @transform_5(%arg0: i32) -> (i32, i32) {
    %c0_i32 = arith.constant 0 : i32
    %c0_i32_0 = arith.constant 0 : i32
    %c0_i32_1 = arith.constant 0 : i32
    return %c0_i32, %c0_i32_0 : i32, i32
  }
  func.func @transform_6(%arg0: i32) -> (i32, i32) {
    %c0_i32 = arith.constant 0 : i32
    %c0_i32_0 = arith.constant 0 : i32
    %c0_i32_1 = arith.constant 0 : i32
    return %c0_i32, %c0_i32_0 : i32, i32
  }
  func.func @transform_7(%arg0: i32) -> (i32, i32) {
    %c0_i32 = arith.constant 0 : i32
    %c0_i32_0 = arith.constant 0 : i32
    %c0_i32_1 = arith.constant 0 : i32
    return %c0_i32, %c0_i32_0 : i32, i32
  }
  func.func @transform_8(%arg0: i32) -> (i32, i32) {
    %c0_i32 = arith.constant 0 : i32
    %c0_i32_0 = arith.constant 0 : i32
    %c0_i32_1 = arith.constant 0 : i32
    return %c0_i32, %c0_i32_0 : i32, i32
  }
  func.func @transform_9(%arg0: i32) -> (i32, i32) {
    %c0_i32 = arith.constant 0 : i32
    %c0_i32_0 = arith.constant 0 : i32
    return %c0_i32, %arg0 : i32, i32
  }
}

</mosaic_0001>

<llo_original>
// kernel: tpu_custom_call.1
$region0: #{tpu_custom_call.1}
  #allocation0 [shape = 'u32[]', space=smem, size = 0x4, offset = 0x4, fixed_abs, tag = 'smem constant byte address 0x4 - core index']
  #allocation1 [shape = 'u32[144,128]{1,0:T(1,128)}', space=vmem, size = 0x12000, scoped, tag = 'internal scratch']
  #allocation2 [shape = 'f32[1,1]{1,0:T(1,128)S(6)}', space=smem, size = 0x200, scoped, tag = 'scoped memory for tpu_custom_call.1']
  %s0 = inlined_call_operand.vmem [shape: f32[128,32], index: 0, kind: input, shape index: {}]
  %s1 = inlined_call_operand.vmem [shape: f32[128,32], index: 1, kind: input, shape index: {}]
  %s2 = inlined_call_operand.vmem [shape: f32[128,1], index: 2, kind: input, shape index: {}]
  %s3 = inlined_call_operand.vmem [shape: f32[64,128], index: 3, kind: input, shape index: {}]
  %s4 = inlined_call_operand.vmem [shape: f32[64,1], index: 4, kind: input, shape index: {}]
  %s5 = inlined_call_operand.vmem [shape: f32[32,64], index: 5, kind: input, shape index: {}]
  %s6 = inlined_call_operand.vmem [shape: f32[32,1], index: 6, kind: input, shape index: {}]
  %s7 = inlined_call_operand.vmem [shape: f32[32,1], index: 7, kind: input, shape index: {}]
  %s8 = inlined_call_operand.<no memory space> [shape: f32[1,1], index: 8, kind: input, shape index: {}]
  %s9 = inlined_call_operand.hbm [shape: f32[1,128], index: 9, kind: output, shape index: {}]
  %s10 = sld [smem:[#allocation0]]
  $region46: #{tpu_custom_call.1} parent=0
    _
  %s12 = ssub.s32 1, %s10
  %s13 = scalar_select 0, %s12, %s10
  %14 = sst [smem:[#allocation2]] %s8
  $region1: #{tpu_custom_call.1} parent=0
    #allocation3 [shape = 'u8[512]{0}', space=vmem, size = 0x400, scoped, tag = 'output window, operand 0, single buffered']
    #allocation4 [shape = 's32[1]{0}', space=sflag, size = 0x4, scoped, tag = 'scoped memory for tpu_custom_call.1']
    %15 = vsyncpa [#allocation4], 0
    // Predicated region
    $region2: #{tpu_custom_call.1} parent=1 // pred_check
      _
    $region3: #{tpu_custom_call.1} parent=1 // pred_check_branch
      %17 = sbr.rel (0) target = $region5
    $region4: #{tpu_custom_call.1} parent=1 // pred_region
      _
    $region5: #{tpu_custom_call.1} parent=1 // pred_fallthru
      _
    // Predicated region
    $region6: #{tpu_custom_call.1} parent=1 // pred_check
      _
    $region7: #{tpu_custom_call.1} parent=1 // pred_check_branch
      %19 = sbr.rel (0) target = $region9
    $region8: #{tpu_custom_call.1} parent=1 // pred_region
      _
    $region9: #{tpu_custom_call.1} parent=1 // pred_fallthru
      _
    // Predicated region
    $region10: #{tpu_custom_call.1} parent=1 // pred_check
      _
    $region11: #{tpu_custom_call.1} parent=1 // pred_check_branch
      %21 = sbr.rel (0) target = $region13
    $region12: #{tpu_custom_call.1} parent=1 // pred_region
      _
    $region13: #{tpu_custom_call.1} parent=1 // pred_fallthru
      _
    // Predicated region
    $region14: #{tpu_custom_call.1} parent=1 // pred_check
      _
    $region15: #{tpu_custom_call.1} parent=1 // pred_check_branch
      %23 = sbr.rel (0) target = $region17
    $region16: #{tpu_custom_call.1} parent=1 // pred_region
      _
    $region17: #{tpu_custom_call.1} parent=1 // pred_fallthru
      _
    // Predicated region
    $region18: #{tpu_custom_call.1} parent=1 // pred_check
      _
    $region19: #{tpu_custom_call.1} parent=1 // pred_check_branch
      %25 = sbr.rel (0) target = $region21
    $region20: #{tpu_custom_call.1} parent=1 // pred_region
      _
    $region21: #{tpu_custom_call.1} parent=1 // pred_fallthru
      _
    // Predicated region
    $region22: #{tpu_custom_call.1} parent=1 // pred_check
      _
    $region23: #{tpu_custom_call.1} parent=1 // pred_check_branch
      %27 = sbr.rel (0) target = $region25
    $region24: #{tpu_custom_call.1} parent=1 // pred_region
      _
    $region25: #{tpu_custom_call.1} parent=1 // pred_fallthru
      _
    // Predicated region
    $region26: #{tpu_custom_call.1} parent=1 // pred_check
      _
    $region27: #{tpu_custom_call.1} parent=1 // pred_check_branch
      %29 = sbr.rel (0) target = $region29
    $region28: #{tpu_custom_call.1} parent=1 // pred_region
      _
    $region29: #{tpu_custom_call.1} parent=1 // pred_fallthru
      _
    // Predicated region
    $region30: #{tpu_custom_call.1} parent=1 // pred_check
      _
    $region31: #{tpu_custom_call.1} parent=1 // pred_check_branch
      %31 = sbr.rel (0) target = $region33
    $region32: #{tpu_custom_call.1} parent=1 // pred_region
      _
    $region33: #{tpu_custom_call.1} parent=1 // pred_fallthru
      _
    // Predicated region
    $region34: #{tpu_custom_call.1} parent=1 // pred_check
      _
    $region35: #{tpu_custom_call.1} parent=1 // pred_check_branch
      %33 = sbr.rel (0) target = $region37
    $region36: #{tpu_custom_call.1} parent=1 // pred_region
      _
    $region37: #{tpu_custom_call.1} parent=1 // pred_fallthru
      _
    %v34 = vld [vmem:[%s1] sm:$0xff]
    %v35 = vld [vmem:[%s1 + $0x8] sm:$0xff]
    %v36 = vld [vmem:[%s1 + $0x10] sm:$0xff]
    %v37 = vld [vmem:[%s1 + $0x18] sm:$0xff]
    %v38 = vld [vmem:[%s1 + $0x20] sm:$0xff]
    %v39 = vld [vmem:[%s1 + $0x28] sm:$0xff]
    %v40 = vld [vmem:[%s1 + $0x30] sm:$0xff]
    %v41 = vld [vmem:[%s1 + $0x38] sm:$0xff]
    %v42 = vld [vmem:[%s1 + $0x40] sm:$0xff]
    %v43 = vld [vmem:[%s1 + $0x48] sm:$0xff]
    %v44 = vld [vmem:[%s1 + $0x50] sm:$0xff]
    %v45 = vld [vmem:[%s1 + $0x58] sm:$0xff]
    %v46 = vld [vmem:[%s1 + $0x60] sm:$0xff]
    %v47 = vld [vmem:[%s1 + $0x68] sm:$0xff]
    %v48 = vld [vmem:[%s1 + $0x70] sm:$0xff]
    %v49 = vld [vmem:[%s1 + $0x78] sm:$0xff]
    %v50 = vld [vmem:[%s0] sm:$0xff]
    %v51 = vld [vmem:[%s0 + $0x8] sm:$0xff]
    %v52 = vld [vmem:[%s0 + $0x10] sm:$0xff]
    %v53 = vld [vmem:[%s0 + $0x18] sm:$0xff]
    %v54 = vld [vmem:[%s0 + $0x20] sm:$0xff]
    %v55 = vld [vmem:[%s0 + $0x28] sm:$0xff]
    %v56 = vld [vmem:[%s0 + $0x30] sm:$0xff]
    %v57 = vld [vmem:[%s0 + $0x38] sm:$0xff]
    %v58 = vld [vmem:[%s0 + $0x40] sm:$0xff]
    %v59 = vld [vmem:[%s0 + $0x48] sm:$0xff]
    %v60 = vld [vmem:[%s0 + $0x50] sm:$0xff]
    %v61 = vld [vmem:[%s0 + $0x58] sm:$0xff]
    %v62 = vld [vmem:[%s0 + $0x60] sm:$0xff]
    %v63 = vld [vmem:[%s0 + $0x68] sm:$0xff]
    %v64 = vld [vmem:[%s0 + $0x70] sm:$0xff]
    %v65 = vld [vmem:[%s0 + $0x78] sm:$0xff]
    %v66 = vld [vmem:[%s2] sm:$0xff]
    %v67 = vld [vmem:[%s2 + $0x8] sm:$0xff]
    %v68 = vld [vmem:[%s2 + $0x10] sm:$0xff]
    %v69 = vld [vmem:[%s2 + $0x18] sm:$0xff]
    %v70 = vld [vmem:[%s2 + $0x20] sm:$0xff]
    %v71 = vld [vmem:[%s2 + $0x28] sm:$0xff]
    %v72 = vld [vmem:[%s2 + $0x30] sm:$0xff]
    %v73 = vld [vmem:[%s2 + $0x38] sm:$0xff]
    %v74 = vld [vmem:[%s2 + $0x40] sm:$0xff]
    %v75 = vld [vmem:[%s2 + $0x48] sm:$0xff]
    %v76 = vld [vmem:[%s2 + $0x50] sm:$0xff]
    %v77 = vld [vmem:[%s2 + $0x58] sm:$0xff]
    %v78 = vld [vmem:[%s2 + $0x60] sm:$0xff]
    %v79 = vld [vmem:[%s2 + $0x68] sm:$0xff]
    %v80 = vld [vmem:[%s2 + $0x70] sm:$0xff]
    %v81 = vld [vmem:[%s2 + $0x78] sm:$0xff]
    %83 = vset.pattern.permute.xlu0 0
    %84 = vperm.xlu0 %83, %v66
    %v85 = vpop.permute.xlu0 %84
    %88 = vset.pattern.permute.xlu0 0
    %89 = vperm.xlu0 %88, %v67
    %v90 = vpop.permute.xlu0 %89
    %93 = vset.pattern.permute.xlu0 0
    %94 = vperm.xlu0 %93, %v68
    %v95 = vpop.permute.xlu0 %94
    %98 = vset.pattern.permute.xlu0 0
    %99 = vperm.xlu0 %98, %v69
    %v100 = vpop.permute.xlu0 %99
    %103 = vset.pattern.permute.xlu0 0
    %104 = vperm.xlu0 %103, %v70
    %v105 = vpop.permute.xlu0 %104
    %108 = vset.pattern.permute.xlu0 0
    %109 = vperm.xlu0 %108, %v71
    %v110 = vpop.permute.xlu0 %109
    %113 = vset.pattern.permute.xlu0 0
    %114 = vperm.xlu0 %113, %v72
    %v115 = vpop.permute.xlu0 %114
    %118 = vset.pattern.permute.xlu0 0
    %119 = vperm.xlu0 %118, %v73
    %v120 = vpop.permute.xlu0 %119
    %123 = vset.pattern.permute.xlu0 0
    %124 = vperm.xlu0 %123, %v74
    %v125 = vpop.permute.xlu0 %124
    %128 = vset.pattern.permute.xlu0 0
    %129 = vperm.xlu0 %128, %v75
    %v130 = vpop.permute.xlu0 %129
    %133 = vset.pattern.permute.xlu0 0
    %134 = vperm.xlu0 %133, %v76
    %v135 = vpop.permute.xlu0 %134
    %138 = vset.pattern.permute.xlu0 0
    %139 = vperm.xlu0 %138, %v77
    %v140 = vpop.permute.xlu0 %139
    %143 = vset.pattern.permute.xlu0 0
    %144 = vperm.xlu0 %143, %v78
    %v145 = vpop.permute.xlu0 %144
    %148 = vset.pattern.permute.xlu0 0
    %149 = vperm.xlu0 %148, %v79
    %v150 = vpop.permute.xlu0 %149
    %153 = vset.pattern.permute.xlu0 0
    %154 = vperm.xlu0 %153, %v80
    %v155 = vpop.permute.xlu0 %154
    %158 = vset.pattern.permute.xlu0 0
    %159 = vperm.xlu0 %158, %v81
    %v160 = vpop.permute.xlu0 %159
    %vm162 = vcmask 261120
    %v164 = vsel %vm162, %v34, 0
    %v167 = vsel %vm162, %v35, 0
    %v170 = vsel %vm162, %v36, 0
    %v173 = vsel %vm162, %v37, 0
    %v176 = vsel %vm162, %v38, 0
    %v179 = vsel %vm162, %v39, 0
    %v182 = vsel %vm162, %v40, 0
    %v185 = vsel %vm162, %v41, 0
    %v188 = vsel %vm162, %v42, 0
    %v191 = vsel %vm162, %v43, 0
    %v194 = vsel %vm162, %v44, 0
    %v197 = vsel %vm162, %v45, 0
    %v200 = vsel %vm162, %v46, 0
    %v203 = vsel %vm162, %v47, 0
    %v206 = vsel %vm162, %v48, 0
    %v209 = vsel %vm162, %v49, 0
    %v212 = vsel %vm162, %v50, 0
    %v215 = vsel %vm162, %v51, 0
    %v218 = vsel %vm162, %v52, 0
    %v221 = vsel %vm162, %v53, 0
    %v224 = vsel %vm162, %v54, 0
    %v227 = vsel %vm162, %v55, 0
    %v230 = vsel %vm162, %v56, 0
    %v233 = vsel %vm162, %v57, 0
    %v236 = vsel %vm162, %v58, 0
    %v239 = vsel %vm162, %v59, 0
    %v242 = vsel %vm162, %v60, 0
    %v245 = vsel %vm162, %v61, 0
    %v248 = vsel %vm162, %v62, 0
    %v251 = vsel %vm162, %v63, 0
    %v254 = vsel %vm162, %v64, 0
    %v257 = vsel %vm162, %v65, 0
    %259 = vmatprep.subr.mxu0 0.0
    %260 = vmatpush1.xpose.msra.mxu0 %v257
    %261 = vmatprep.subr.mxu0 0.0
    %262 = vmatpush1.xpose.msra.mxu0 %v254
    %263 = vmatprep.subr.mxu0 0.0
    %264 = vmatpush1.xpose.msra.mxu0 %v251
    %265 = vmatprep.subr.mxu0 0.0
    %266 = vmatpush1.xpose.msra.mxu0 %v248
    %267 = vmatprep.subr.mxu0 0.0
    %268 = vmatpush1.xpose.msra.mxu0 %v245
    %269 = vmatprep.subr.mxu0 0.0
    %270 = vmatpush1.xpose.msra.mxu0 %v242
    %271 = vmatprep.subr.mxu0 0.0
    %272 = vmatpush1.xpose.msra.mxu0 %v239
    %273 = vmatprep.subr.mxu0 0.0
    %274 = vmatpush1.xpose.msra.mxu0 %v236
    %275 = vmatprep.subr.mxu0 0.0
    %276 = vmatpush1.xpose.msra.mxu0 %v233
    %277 = vmatprep.subr.mxu0 0.0
    %278 = vmatpush1.xpose.msra.mxu0 %v230
    %279 = vmatprep.subr.mxu0 0.0
    %280 = vmatpush1.xpose.msra.mxu0 %v227
    %281 = vmatprep.subr.mxu0 0.0
    %282 = vmatpush1.xpose.msra.mxu0 %v224
    %283 = vmatprep.subr.mxu0 0.0
    %284 = vmatpush1.xpose.msra.mxu0 %v221
    %285 = vmatprep.subr.mxu0 0.0
    %286 = vmatpush1.xpose.msra.mxu0 %v218
    %287 = vmatprep.subr.mxu0 0.0
    %288 = vmatpush1.xpose.msra.mxu0 %v215
    %289 = vmatprep.subr.mxu0 0.0
    %290 = vmatpush1.xpose.msra.mxu0 %v212
    %291 = vmatprep.subr.mxu0 0.0
    %292 = vmatpush2.xpose.msra.mxu0 0.0
    %293 = vmatprep.subr.mxu0 0.0
    %294 = vmatpush2.xpose.msra.mxu0 0.0
    %295 = vmatprep.subr.mxu0 0.0
    %296 = vmatpush2.xpose.msra.mxu0 0.0
    %297 = vmatprep.subr.mxu0 0.0
    %298 = vmatpush2.xpose.msra.mxu0 0.0
    %299 = vmatprep.subr.mxu0 0.0
    %300 = vmatpush2.xpose.msra.mxu0 0.0
    %301 = vmatprep.subr.mxu0 0.0
    %302 = vmatpush2.xpose.msra.mxu0 0.0
    %303 = vmatprep.subr.mxu0 0.0
    %304 = vmatpush2.xpose.msra.mxu0 0.0
    %305 = vmatprep.subr.mxu0 0.0
    %306 = vmatpush2.xpose.msra.mxu0 0.0
    %307 = vmatprep.subr.mxu0 0.0
    %308 = vmatpush2.xpose.msra.mxu0 0.0
    %309 = vmatprep.subr.mxu0 0.0
    %310 = vmatpush2.xpose.msra.mxu0 0.0
    %311 = vmatprep.subr.mxu0 0.0
    %312 = vmatpush2.xpose.msra.mxu0 0.0
    %313 = vmatprep.subr.mxu0 0.0
    %314 = vmatpush2.xpose.msra.mxu0 0.0
    %315 = vmatprep.subr.mxu0 0.0
    %316 = vmatpush2.xpose.msra.mxu0 0.0
    %317 = vmatprep.subr.mxu0 0.0
    %318 = vmatpush2.xpose.msra.mxu0 0.0
    %319 = vmatprep.subr.mxu0 0.0
    %320 = vmatpush2.xpose.msra.mxu0 0.0
    %321 = vmatprep.subr.mxu0 0.0
    %322 = vmatpush2.xpose.msra.mxu0 0.0
    %323 = vmatprep.mubr.f32.mxu0 0.0
    %324 = vmatmul.mubr.f32.gmra.mxu0 %v164
    %v325 = vpop.f32.mrf.mxu0
    %v326 = vadd.f32 %v85, %v325
    %v327 = vpop.f32.mrf.mxu0
    %328 = vmatprep.mubr.f32.mxu0 0.0
    %329 = vmatmul.mubr.f32.gmra.mxu0 %v167
    %v330 = vpop.f32.mrf.mxu0
    %v331 = vadd.f32 %v90, %v330
    %v332 = vpop.f32.mrf.mxu0
    %333 = vmatprep.mubr.f32.mxu0 0.0
    %334 = vmatmul.mubr.f32.gmra.mxu0 %v170
    %v335 = vpop.f32.mrf.mxu0
    %v336 = vadd.f32 %v95, %v335
    %v337 = vpop.f32.mrf.mxu0
    %338 = vmatprep.mubr.f32.mxu0 0.0
    %339 = vmatmul.mubr.f32.gmra.mxu0 %v173
    %v340 = vpop.f32.mrf.mxu0
    %v341 = vadd.f32 %v100, %v340
    %v342 = vpop.f32.mrf.mxu0
    %343 = vmatprep.mubr.f32.mxu0 0.0
    %344 = vmatmul.mubr.f32.gmra.mxu0 %v176
    %v345 = vpop.f32.mrf.mxu0
    %v346 = vadd.f32 %v105, %v345
    %v347 = vpop.f32.mrf.mxu0
    %348 = vmatprep.mubr.f32.mxu0 0.0
    %349 = vmatmul.mubr.f32.gmra.mxu0 %v179
    %v350 = vpop.f32.mrf.mxu0
    %v351 = vadd.f32 %v110, %v350
    %v352 = vpop.f32.mrf.mxu0
    %353 = vmatprep.mubr.f32.mxu0 0.0
    %354 = vmatmul.mubr.f32.gmra.mxu0 %v182
    %v355 = vpop.f32.mrf.mxu0
    %v356 = vadd.f32 %v115, %v355
    %v357 = vpop.f32.mrf.mxu0
    %358 = vmatprep.mubr.f32.mxu0 0.0
    %359 = vmatmul.mubr.f32.gmra.mxu0 %v185
    %v360 = vpop.f32.mrf.mxu0
    %v361 = vadd.f32 %v120, %v360
    %v362 = vpop.f32.mrf.mxu0
    %363 = vmatprep.mubr.f32.mxu0 0.0
    %364 = vmatmul.mubr.f32.gmra.mxu0 %v188
    %v365 = vpop.f32.mrf.mxu0
    %v366 = vadd.f32 %v125, %v365
    %v367 = vpop.f32.mrf.mxu0
    %368 = vmatprep.mubr.f32.mxu0 0.0
    %369 = vmatmul.mubr.f32.gmra.mxu0 %v191
    %v370 = vpop.f32.mrf.mxu0
    %v371 = vadd.f32 %v130, %v370
    %v372 = vpop.f32.mrf.mxu0
    %373 = vmatprep.mubr.f32.mxu0 0.0
    %374 = vmatmul.mubr.f32.gmra.mxu0 %v194
    %v375 = vpop.f32.mrf.mxu0
    %v376 = vadd.f32 %v135, %v375
    %v377 = vpop.f32.mrf.mxu0
    %378 = vmatprep.mubr.f32.mxu0 0.0
    %379 = vmatmul.mubr.f32.gmra.mxu0 %v197
    %v380 = vpop.f32.mrf.mxu0
    %v381 = vadd.f32 %v140, %v380
    %v382 = vpop.f32.mrf.mxu0
    %383 = vmatprep.mubr.f32.mxu0 0.0
    %384 = vmatmul.mubr.f32.gmra.mxu0 %v200
    %v385 = vpop.f32.mrf.mxu0
    %v386 = vadd.f32 %v145, %v385
    %v387 = vpop.f32.mrf.mxu0
    %388 = vmatprep.mubr.f32.mxu0 0.0
    %389 = vmatmul.mubr.f32.gmra.mxu0 %v203
    %v390 = vpop.f32.mrf.mxu0
    %v391 = vadd.f32 %v150, %v390
    %v392 = vpop.f32.mrf.mxu0
    %393 = vmatprep.mubr.f32.mxu0 0.0
    %394 = vmatmul.mubr.f32.gmra.mxu0 %v206
    %v395 = vpop.f32.mrf.mxu0
    %v396 = vadd.f32 %v155, %v395
    %v397 = vpop.f32.mrf.mxu0
    %398 = vmatprep.mubr.f32.mxu0 0.0
    %399 = vmatmul.mubr.f32.gmra.mxu0 %v209
    %v400 = vpop.f32.mrf.mxu0
    %v401 = vadd.f32 %v160, %v400
    %v402 = vpop.f32.mrf.mxu0
    %403 = vdwg.mxu0
    %v404 = vmax.f32 %v326, 0.0
    %v405 = vmax.f32 %v331, 0.0
    %v406 = vmax.f32 %v336, 0.0
    %v407 = vmax.f32 %v341, 0.0
    %v408 = vmax.f32 %v346, 0.0
    %v409 = vmax.f32 %v351, 0.0
    %v410 = vmax.f32 %v356, 0.0
    %v411 = vmax.f32 %v361, 0.0
    %v412 = vmax.f32 %v366, 0.0
    %v413 = vmax.f32 %v371, 0.0
    %v414 = vmax.f32 %v376, 0.0
    %v415 = vmax.f32 %v381, 0.0
    %v416 = vmax.f32 %v386, 0.0
    %v417 = vmax.f32 %v391, 0.0
    %v418 = vmax.f32 %v396, 0.0
    %v419 = vmax.f32 %v401, 0.0
    %v420 = vld [vmem:[%s3] sm:$0xff]
    %v421 = vld [vmem:[%s3 + $0x8] sm:$0xff]
    %v422 = vld [vmem:[%s3 + $0x10] sm:$0xff]
    %v423 = vld [vmem:[%s3 + $0x18] sm:$0xff]
    %v424 = vld [vmem:[%s3 + $0x20] sm:$0xff]
    %v425 = vld [vmem:[%s3 + $0x28] sm:$0xff]
    %v426 = vld [vmem:[%s3 + $0x30] sm:$0xff]
    %v427 = vld [vmem:[%s3 + $0x38] sm:$0xff]
    %v428 = vld [vmem:[%s4] sm:$0xff]
    %v429 = vld [vmem:[%s4 + $0x8] sm:$0xff]
    %v430 = vld [vmem:[%s4 + $0x10] sm:$0xff]
    %v431 = vld [vmem:[%s4 + $0x18] sm:$0xff]
    %v432 = vld [vmem:[%s4 + $0x20] sm:$0xff]
    %v433 = vld [vmem:[%s4 + $0x28] sm:$0xff]
    %v434 = vld [vmem:[%s4 + $0x30] sm:$0xff]
    %v435 = vld [vmem:[%s4 + $0x38] sm:$0xff]
    %437 = vset.pattern.permute.xlu0 0
    %438 = vperm.xlu0 %437, %v428
    %v439 = vpop.permute.xlu0 %438
    %442 = vset.pattern.permute.xlu0 0
    %443 = vperm.xlu0 %442, %v429
    %v444 = vpop.permute.xlu0 %443
    %447 = vset.pattern.permute.xlu0 0
    %448 = vperm.xlu0 %447, %v430
    %v449 = vpop.permute.xlu0 %448
    %452 = vset.pattern.permute.xlu0 0
    %453 = vperm.xlu0 %452, %v431
    %v454 = vpop.permute.xlu0 %453
    %457 = vset.pattern.permute.xlu0 0
    %458 = vperm.xlu0 %457, %v432
    %v459 = vpop.permute.xlu0 %458
    %462 = vset.pattern.permute.xlu0 0
    %463 = vperm.xlu0 %462, %v433
    %v464 = vpop.permute.xlu0 %463
    %467 = vset.pattern.permute.xlu0 0
    %468 = vperm.xlu0 %467, %v434
    %v469 = vpop.permute.xlu0 %468
    %472 = vset.pattern.permute.xlu0 0
    %473 = vperm.xlu0 %472, %v435
    %v474 = vpop.permute.xlu0 %473
    %476 = vmatprep.subr.mxu0 0.0
    %477 = vmatpush1.msra.mxu0 %v419
    %478 = vmatprep.subr.mxu0 0.0
    %479 = vmatpush1.msra.mxu0 %v418
    %480 = vmatprep.subr.mxu0 0.0
    %481 = vmatpush1.msra.mxu0 %v417
    %482 = vmatprep.subr.mxu0 0.0
    %483 = vmatpush1.msra.mxu0 %v416
    %484 = vmatprep.subr.mxu0 0.0
    %485 = vmatpush1.msra.mxu0 %v415
    %486 = vmatprep.subr.mxu0 0.0
    %487 = vmatpush1.msra.mxu0 %v414
    %488 = vmatprep.subr.mxu0 0.0
    %489 = vmatpush1.msra.mxu0 %v413
    %490 = vmatprep.subr.mxu0 0.0
    %491 = vmatpush1.msra.mxu0 %v412
    %492 = vmatprep.subr.mxu0 0.0
    %493 = vmatpush1.msra.mxu0 %v411
    %494 = vmatprep.subr.mxu0 0.0
    %495 = vmatpush1.msra.mxu0 %v410
    %496 = vmatprep.subr.mxu0 0.0
    %497 = vmatpush1.msra.mxu0 %v409
    %498 = vmatprep.subr.mxu0 0.0
    %499 = vmatpush1.msra.mxu0 %v408
    %500 = vmatprep.subr.mxu0 0.0
    %501 = vmatpush1.msra.mxu0 %v407
    %502 = vmatprep.subr.mxu0 0.0
    %503 = vmatpush1.msra.mxu0 %v406
    %504 = vmatprep.subr.mxu0 0.0
    %505 = vmatpush1.msra.mxu0 %v405
    %506 = vmatprep.subr.mxu0 0.0
    %507 = vmatpush1.msra.mxu0 %v404
    %508 = vmatprep.subr.mxu0 0.0
    %509 = vmatpush2.msra.mxu0 0.0
    %510 = vmatprep.subr.mxu0 0.0
    %511 = vmatpush2.msra.mxu0 0.0
    %512 = vmatprep.subr.mxu0 0.0
    %513 = vmatpush2.msra.mxu0 0.0
    %514 = vmatprep.subr.mxu0 0.0
    %515 = vmatpush2.msra.mxu0 0.0
    %516 = vmatprep.subr.mxu0 0.0
    %517 = vmatpush2.msra.mxu0 0.0
    %518 = vmatprep.subr.mxu0 0.0
    %519 = vmatpush2.msra.mxu0 0.0
    %520 = vmatprep.subr.mxu0 0.0
    %521 = vmatpush2.msra.mxu0 0.0
    %522 = vmatprep.subr.mxu0 0.0
    %523 = vmatpush2.msra.mxu0 0.0
    %524 = vmatprep.subr.mxu0 0.0
    %525 = vmatpush2.msra.mxu0 0.0
    %526 = vmatprep.subr.mxu0 0.0
    %527 = vmatpush2.msra.mxu0 0.0
    %528 = vmatprep.subr.mxu0 0.0
    %529 = vmatpush2.msra.mxu0 0.0
    %530 = vmatprep.subr.mxu0 0.0
    %531 = vmatpush2.msra.mxu0 0.0
    %532 = vmatprep.subr.mxu0 0.0
    %533 = vmatpush2.msra.mxu0 0.0
    %534 = vmatprep.subr.mxu0 0.0
    %535 = vmatpush2.msra.mxu0 0.0
    %536 = vmatprep.subr.mxu0 0.0
    %537 = vmatpush2.msra.mxu0 0.0
    %538 = vmatprep.subr.mxu0 0.0
    %539 = vmatpush2.msra.mxu0 0.0
    %540 = vmatprep.mubr.f32.mxu0 0.0
    %541 = vmatmul.mubr.f32.gmra.mxu0 %v420
    %v542 = vpop.f32.mrf.mxu0
    %v543 = vadd.f32 %v439, %v542
    %v544 = vpop.f32.mrf.mxu0
    %545 = vmatprep.mubr.f32.mxu0 0.0
    %546 = vmatmul.mubr.f32.gmra.mxu0 %v421
    %v547 = vpop.f32.mrf.mxu0
    %v548 = vadd.f32 %v444, %v547
    %v549 = vpop.f32.mrf.mxu0
    %550 = vmatprep.mubr.f32.mxu0 0.0
    %551 = vmatmul.mubr.f32.gmra.mxu0 %v422
    %v552 = vpop.f32.mrf.mxu0
    %v553 = vadd.f32 %v449, %v552
    %v554 = vpop.f32.mrf.mxu0
    %555 = vmatprep.mubr.f32.mxu0 0.0
    %556 = vmatmul.mubr.f32.gmra.mxu0 %v423
    %v557 = vpop.f32.mrf.mxu0
    %v558 = vadd.f32 %v454, %v557
    %v559 = vpop.f32.mrf.mxu0
    %560 = vmatprep.mubr.f32.mxu0 0.0
    %561 = vmatmul.mubr.f32.gmra.mxu0 %v424
    %v562 = vpop.f32.mrf.mxu0
    %v563 = vadd.f32 %v459, %v562
    %v564 = vpop.f32.mrf.mxu0
    %565 = vmatprep.mubr.f32.mxu0 0.0
    %566 = vmatmul.mubr.f32.gmra.mxu0 %v425
    %v567 = vpop.f32.mrf.mxu0
    %v568 = vadd.f32 %v464, %v567
    %v569 = vpop.f32.mrf.mxu0
    %570 = vmatprep.mubr.f32.mxu0 0.0
    %571 = vmatmul.mubr.f32.gmra.mxu0 %v426
    %v572 = vpop.f32.mrf.mxu0
    %v573 = vadd.f32 %v469, %v572
    %v574 = vpop.f32.mrf.mxu0
    %575 = vmatprep.mubr.f32.mxu0 0.0
    %576 = vmatmul.mubr.f32.gmra.mxu0 %v427
    %v577 = vpop.f32.mrf.mxu0
    %v578 = vadd.f32 %v474, %v577
    %v579 = vpop.f32.mrf.mxu0
    %580 = vdwg.mxu0
    %v581 = vmax.f32 %v543, 0.0
    %v582 = vmax.f32 %v548, 0.0
    %v583 = vmax.f32 %v553, 0.0
    %v584 = vmax.f32 %v558, 0.0
    %v585 = vmax.f32 %v563, 0.0
    %v586 = vmax.f32 %v568, 0.0
    %v587 = vmax.f32 %v573, 0.0
    %v588 = vmax.f32 %v578, 0.0
    %v589 = vld [vmem:[%s5] sm:$0xff]
    %v590 = vld [vmem:[%s5 + $0x8] sm:$0xff]
    %v591 = vld [vmem:[%s5 + $0x10] sm:$0xff]
    %v592 = vld [vmem:[%s5 + $0x18] sm:$0xff]
    %v593 = vld [vmem:[%s6] sm:$0xff]
    %v594 = vld [vmem:[%s6 + $0x8] sm:$0xff]
    %v595 = vld [vmem:[%s6 + $0x10] sm:$0xff]
    %v596 = vld [vmem:[%s6 + $0x18] sm:$0xff]
    %598 = vset.pattern.permute.xlu0 0
    %599 = vperm.xlu0 %598, %v593
    %v600 = vpop.permute.xlu0 %599
    %603 = vset.pattern.permute.xlu0 0
    %604 = vperm.xlu0 %603, %v594
    %v605 = vpop.permute.xlu0 %604
    %608 = vset.pattern.permute.xlu0 0
    %609 = vperm.xlu0 %608, %v595
    %v610 = vpop.permute.xlu0 %609
    %613 = vset.pattern.permute.xlu0 0
    %614 = vperm.xlu0 %613, %v596
    %v615 = vpop.permute.xlu0 %614
    %vm617 = vcmask 523264
    %v619 = vsel %vm617, %v589, 0
    %v622 = vsel %vm617, %v590, 0
    %v625 = vsel %vm617, %v591, 0
    %v628 = vsel %vm617, %v592, 0
    %630 = vmatprep.subr.mxu0 0.0
    %631 = vmatpush1.msra.mxu0 0.0
    %632 = vmatprep.subr.mxu0 0.0
    %633 = vmatpush1.msra.mxu0 0.0
    %634 = vmatprep.subr.mxu0 0.0
    %635 = vmatpush1.msra.mxu0 0.0
    %636 = vmatprep.subr.mxu0 0.0
    %637 = vmatpush1.msra.mxu0 0.0
    %638 = vmatprep.subr.mxu0 0.0
    %639 = vmatpush1.msra.mxu0 0.0
    %640 = vmatprep.subr.mxu0 0.0
    %641 = vmatpush1.msra.mxu0 0.0
    %642 = vmatprep.subr.mxu0 0.0
    %643 = vmatpush1.msra.mxu0 0.0
    %644 = vmatprep.subr.mxu0 0.0
    %645 = vmatpush1.msra.mxu0 0.0
    %646 = vmatprep.subr.mxu0 0.0
    %647 = vmatpush1.msra.mxu0 %v588
    %648 = vmatprep.subr.mxu0 0.0
    %649 = vmatpush1.msra.mxu0 %v587
    %650 = vmatprep.subr.mxu0 0.0
    %651 = vmatpush1.msra.mxu0 %v586
    %652 = vmatprep.subr.mxu0 0.0
    %653 = vmatpush1.msra.mxu0 %v585
    %654 = vmatprep.subr.mxu0 0.0
    %655 = vmatpush1.msra.mxu0 %v584
    %656 = vmatprep.subr.mxu0 0.0
    %657 = vmatpush1.msra.mxu0 %v583
    %658 = vmatprep.subr.mxu0 0.0
    %659 = vmatpush1.msra.mxu0 %v582
    %660 = vmatprep.subr.mxu0 0.0
    %661 = vmatpush1.msra.mxu0 %v581
    %662 = vmatprep.subr.mxu0 0.0
    %663 = vmatpush2.msra.mxu0 0.0
    %664 = vmatprep.subr.mxu0 0.0
    %665 = vmatpush2.msra.mxu0 0.0
    %666 = vmatprep.subr.mxu0 0.0
    %667 = vmatpush2.msra.mxu0 0.0
    %668 = vmatprep.subr.mxu0 0.0
    %669 = vmatpush2.msra.mxu0 0.0
    %670 = vmatprep.subr.mxu0 0.0
    %671 = vmatpush2.msra.mxu0 0.0
    %672 = vmatprep.subr.mxu0 0.0
    %673 = vmatpush2.msra.mxu0 0.0
    %674 = vmatprep.subr.mxu0 0.0
    %675 = vmatpush2.msra.mxu0 0.0
    %676 = vmatprep.subr.mxu0 0.0
    %677 = vmatpush2.msra.mxu0 0.0
    %678 = vmatprep.subr.mxu0 0.0
    %679 = vmatpush2.msra.mxu0 0.0
    %680 = vmatprep.subr.mxu0 0.0
    %681 = vmatpush2.msra.mxu0 0.0
    %682 = vmatprep.subr.mxu0 0.0
    %683 = vmatpush2.msra.mxu0 0.0
    %684 = vmatprep.subr.mxu0 0.0
    %685 = vmatpush2.msra.mxu0 0.0
    %686 = vmatprep.subr.mxu0 0.0
    %687 = vmatpush2.msra.mxu0 0.0
    %688 = vmatprep.subr.mxu0 0.0
    %689 = vmatpush2.msra.mxu0 0.0
    %690 = vmatprep.subr.mxu0 0.0
    %691 = vmatpush2.msra.mxu0 0.0
    %692 = vmatprep.subr.mxu0 0.0
    %693 = vmatpush2.msra.mxu0 0.0
    %694 = vmatprep.mubr.f32.mxu0 0.0
    %695 = vmatmul.mubr.f32.gmra.mxu0 %v619
    %v696 = vpop.f32.mrf.mxu0
    %v697 = vadd.f32 %v600, %v696
    %v698 = vpop.f32.mrf.mxu0
    %699 = vmatprep.mubr.f32.mxu0 0.0
    %700 = vmatmul.mubr.f32.gmra.mxu0 %v622
    %v701 = vpop.f32.mrf.mxu0
    %v702 = vadd.f32 %v605, %v701
    %v703 = vpop.f32.mrf.mxu0
    %704 = vmatprep.mubr.f32.mxu0 0.0
    %705 = vmatmul.mubr.f32.gmra.mxu0 %v625
    %v706 = vpop.f32.mrf.mxu0
    %v707 = vadd.f32 %v610, %v706
    %v708 = vpop.f32.mrf.mxu0
    %709 = vmatprep.mubr.f32.mxu0 0.0
    %710 = vmatmul.mubr.f32.gmra.mxu0 %v628
    %v711 = vpop.f32.mrf.mxu0
    %v712 = vadd.f32 %v615, %v711
    %v713 = vpop.f32.mrf.mxu0
    %714 = vdwg.mxu0
    %v715 = vmax.f32 %v697, 0.0
    %v716 = vmax.f32 %v702, 0.0
    %v717 = vmax.f32 %v707, 0.0
    %v718 = vmax.f32 %v712, 0.0
    %v719 = vld [vmem:[%s7] sm:$0xff]
    %v720 = vld [vmem:[%s7 + $0x8] sm:$0xff]
    %v721 = vld [vmem:[%s7 + $0x10] sm:$0xff]
    %v722 = vld [vmem:[%s7 + $0x18] sm:$0xff]
    %724 = vset.pattern.permute.xlu0 0
    %725 = vperm.xlu0 %724, %v719
    %v726 = vpop.permute.xlu0 %725
    %729 = vset.pattern.permute.xlu0 0
    %730 = vperm.xlu0 %729, %v720
    %v731 = vpop.permute.xlu0 %730
    %734 = vset.pattern.permute.xlu0 0
    %735 = vperm.xlu0 %734, %v721
    %v736 = vpop.permute.xlu0 %735
    %739 = vset.pattern.permute.xlu0 0
    %740 = vperm.xlu0 %739, %v722
    %v741 = vpop.permute.xlu0 %740
    %v743 = vmul.f32 %v715, %v726
    %v744 = vmul.f32 %v716, %v731
    %v745 = vmul.f32 %v717, %v736
    %v746 = vmul.f32 %v718, %v741
    %v747 = vadd.f32 %v743, %v744
    %v748 = vadd.f32 %v747, %v745
    %v749 = vadd.f32 %v748, %v746
    %v750 = vrot.slane %v749, 4
    %v751 = vadd.f32 %v749, %v750
    %v752 = vrot.slane %v751, 2
    %v753 = vadd.f32 %v751, %v752
    %v754 = vrot.slane %v753, 1
    %v755 = vadd.f32 %v753, %v754
    %s756 = sld [smem:[#allocation2]]
    %v757 = vstv %s756
    %v758 = vadd.f32 %v755, %v757
    %v759 = vxor.u32 %v758, 2147483648
    %v760 = vmul.f32 %v759, 1.442695
    %v761 = vpow.pop %v760
    %v762 = vadd.f32 %v761, 1.0
    %v763 = vrcp.pop %v762
    %v764 = vmul.f32 1.0, %v763
    %765 = vst [vmem:[#allocation3] sm:$0x1] %v764
    // Predicated region
    $region38: #{tpu_custom_call.1} parent=1 // pred_check
      _
    $region39: #{tpu_custom_call.1} parent=1 // pred_check_branch
      %767 = sbr.rel (0) target = $region41
    $region40: #{tpu_custom_call.1} parent=1 // pred_region
      %s769 = ssub.s32 16, 16
      %770 = vsyncadd [#allocation4], %s769
      %s772 = sshll.u32 [#allocation3], 4
      %s773 = int_to_ptr.vmem [resolvable:$true] %s772
      %775 = dma.vmem_to_hbm [thread:$0]  %s773, 16, %s9, [#allocation4]
    $region41: #{tpu_custom_call.1} parent=1 // pred_fallthru
      _
    // Predicated region
    $region42: #{tpu_custom_call.1} parent=1 // pred_check
      _
    $region43: #{tpu_custom_call.1} parent=1 // pred_check_branch
      %777 = sbr.rel (0) target = $region45
    $region44: #{tpu_custom_call.1} parent=1 // pred_region
      %778 = dma.done [#allocation4], 16
    $region45: #{tpu_custom_call.1} parent=1 // pred_fallthru
      _
    %779 = vsyncpa [#allocation4], 1

</llo_original>
